<compile_context>
chip_gen: v5e
topology: v5e:2x2
jax: 0.10.0
libtpu: 0.0.40
codegen_flags: <defaults>
</compile_context>

<pallas_src>
import jax
import jax.numpy as jnp
from jax.experimental import pallas as pl
from jax.experimental.pallas import tpu as pltpu


def _mlp_kernel(x_ref, w1_ref, b1_ref, w2_ref, b2_ref, w3_ref, b3_ref, o_ref):
    # Layer 1: (tb, D) @ (D, 64) -> f32, + bias, ReLU
    h1 = jnp.dot(x_ref[...], w1_ref[...], preferred_element_type=jnp.float32)
    h1 = jnp.maximum(h1 + b1_ref[...], 0.0)

    # Dropout(0.2): identity in eval mode.
    # TODO(synk): training-mode dropout would use pltpu.prng_seed + pltpu.prng_random_bits.

    # Layer 2: (tb, 64) @ (64, 32) -> f32, + bias, ReLU
    h2 = jnp.dot(h1, w2_ref[...], preferred_element_type=jnp.float32)
    h2 = jnp.maximum(h2 + b2_ref[...], 0.0)

    # Layer 3: (tb, 32) @ (32, 2) -> f32, + bias
    logits = jnp.dot(h2, w3_ref[...], preferred_element_type=jnp.float32)
    o_ref[...] = (logits + b3_ref[...]).astype(o_ref.dtype)


def _round_up(n, m):
    return ((n + m - 1) // m) * m


def _choose_tb(B, D, target_bytes=4 << 20):
    """Rows per grid step: stream ~target_bytes of f32 x per step."""
    tb = max(16, _round_up(target_bytes // (4 * D), 512))
    # Keep >= 4 grid steps when the batch allows (v7x 2-TC split + DMA/compute overlap).
    tb = min(tb, max(16, _round_up(pl.cdiv(B, 4), 16)))
    # Never larger than the (16-row aligned) batch itself.
    tb = min(tb, _round_up(B, 16))
    return tb


@jax.jit
def hiv_classifier_forward(x, params):
    """Fused MLP forward pass as a single batch-tiled Pallas kernel.

    x: (B, input_size) float32
    params: dict with w1 (D,64), b1 (1,64), w2 (64,32), b2 (1,32), w3 (32,2), b3 (1,2)
    returns: (B, 2) float32 logits
    """
    B, D = x.shape
    tb = _choose_tb(B, D)
    grid = (pl.cdiv(B, tb),)

    w1, b1 = params["w1"], params["b1"]
    w2, b2 = params["w2"], params["b2"]
    w3, b3 = params["w3"], params["b3"]

    resident = lambda a: pl.BlockSpec(a.shape, lambda i: (0,) * a.ndim)

    flops = 2 * B * (D * 64 + 64 * 32 + 32 * 2)
    bytes_accessed = (B * D * 4                            # x (f32, one pass)
                      + (D * 64 + 64 * 32 + 32 * 2) * 4    # weights (f32)
                      + (64 + 32 + 2) * 4                  # biases (f32)
                      + B * 2 * 4)                         # logits (f32)

    return pl.pallas_call(
        _mlp_kernel,
        out_shape=jax.ShapeDtypeStruct((B, 2), jnp.float32),
        grid=grid,
        in_specs=[
            pl.BlockSpec((tb, D), lambda i: (i, 0)),   # x: streamed per tile
            resident(w1), resident(b1),                # weights/biases: VMEM-resident
            resident(w2), resident(b2),
            resident(w3), resident(b3),
        ],
        out_specs=pl.BlockSpec((tb, 2), lambda i: (i, 0)),
        compiler_params=pltpu.CompilerParams(
            dimension_semantics=("parallel",)),
        cost_estimate=pl.CostEstimate(
            flops=flops, transcendentals=0, bytes_accessed=bytes_accessed),
    )(x, w1, b1, w2, b2, w3, b3)


def init_params(key, input_size):
    """Deterministic parameter init (same shapes as the PyTorch module)."""
    ks = jax.random.split(key, 6)

    def linear(kw, kb, fan_in, fan_out):
        # Mimic PyTorch's default uniform(-1/sqrt(fan_in), 1/sqrt(fan_in)) init.
        bound = 1.0 / jnp.sqrt(jnp.float32(fan_in))
        w = jax.random.uniform(kw, (fan_in, fan_out), jnp.float32, -bound, bound)
        b = jax.random.uniform(kb, (1, fan_out), jnp.float32, -bound, bound)
        return w, b

    w1, b1 = linear(ks[0], ks[1], input_size, 64)
    w2, b2 = linear(ks[2], ks[3], 64, 32)
    w3, b3 = linear(ks[4], ks[5], 32, 2)
    return {"w1": w1, "b1": b1, "w2": w2, "b2": b2, "w3": w3, "b3": b3}


def _reference(x, p):
    """Pure-JAX f32 reference (matches the PyTorch module's eval forward)."""
    h1 = jnp.maximum(
        jnp.dot(x, p["w1"], preferred_element_type=jnp.float32) + p["b1"], 0.0)
    h2 = jnp.maximum(
        jnp.dot(h1, p["w2"], preferred_element_type=jnp.float32) + p["b2"], 0.0)
    return jnp.dot(h2, p["w3"], preferred_element_type=jnp.float32) + p["b3"]


if __name__ == "__main__":
    key = jax.random.PRNGKey(0)
    k_x, k_p = jax.random.split(key)

    # Small deterministic example; batch=10 exercises the ragged last block.
    batch, input_size = 10, 32
    x = jax.random.normal(k_x, (batch, input_size), jnp.float32)
    params = init_params(k_p, input_size)

    out = hiv_classifier_forward(x, params)
    out = jax.block_until_ready(out)

    ref = _reference(x, params)
    assert out.shape == (batch, 2)
    assert jnp.allclose(out, ref, atol=1e-3, rtol=1e-3), (
        f"max abs err {jnp.max(jnp.abs(out - ref))}")

    print("KERNEL_OK")
</pallas_src>

<mosaic_0001>
module attributes {stable_mosaic.version = 11 : i64} {
  func.func @_mlp_kernel(%arg0: i32, %arg1: memref<16x32xf32, #tpu.memory_space<vmem>>, %arg2: memref<32x64xf32, #tpu.memory_space<vmem>>, %arg3: memref<1x64xf32, #tpu.memory_space<vmem>>, %arg4: memref<64x32xf32, #tpu.memory_space<vmem>>, %arg5: memref<1x32xf32, #tpu.memory_space<vmem>>, %arg6: memref<32x2xf32, #tpu.memory_space<vmem>>, %arg7: memref<1x2xf32, #tpu.memory_space<vmem>>, %arg8: memref<16x2xf32, #tpu.memory_space<vmem>>) attributes {dimension_semantics = [#tpu.dimension_semantics<parallel>], iteration_bounds = array<i64: 1>, scalar_prefetch = 0 : i64, scratch_operands = 0 : i64, tpu.core_type = #tpu.core_type<tc>, window_params = [{transform_indices = @transform_0, window_bounds = array<i64: 16, 32>}, {pipeline_mode = #tpu.pipeline_mode<synchronous>, transform_indices = @transform_1, window_bounds = array<i64: 32, 64>}, {pipeline_mode = #tpu.pipeline_mode<synchronous>, transform_indices = @transform_2, window_bounds = array<i64: 1, 64>}, {pipeline_mode = #tpu.pipeline_mode<synchronous>, transform_indices = @transform_3, window_bounds = array<i64: 64, 32>}, {pipeline_mode = #tpu.pipeline_mode<synchronous>, transform_indices = @transform_4, window_bounds = array<i64: 1, 32>}, {pipeline_mode = #tpu.pipeline_mode<synchronous>, transform_indices = @transform_5, window_bounds = array<i64: 32, 2>}, {pipeline_mode = #tpu.pipeline_mode<synchronous>, transform_indices = @transform_6, window_bounds = array<i64: 1, 2>}, {transform_indices = @transform_7, window_bounds = array<i64: 16, 2>}]} {
    %c0 = arith.constant 0 : index
    %c0_0 = arith.constant 0 : index
    %0 = vector.load %arg1[%c0, %c0_0] : memref<16x32xf32, #tpu.memory_space<vmem>>, vector<16x32xf32>
    %c0_1 = arith.constant 0 : index
    %c0_2 = arith.constant 0 : index
    %1 = vector.load %arg2[%c0_1, %c0_2] : memref<32x64xf32, #tpu.memory_space<vmem>>, vector<32x64xf32>
    %cst = arith.constant dense<0.000000e+00> : vector<16x64xf32>
    %2 = tpu.matmul %0, %1, %cst {dimension_numbers = #tpu.dot_dimension_numbers<[1], [0], [0], [1], [0, 0, 1, 1], [], []>} : vector<16x32xf32>, vector<32x64xf32>, vector<16x64xf32> -> vector<16x64xf32>
    %c0_3 = arith.constant 0 : index
    %c0_4 = arith.constant 0 : index
    %3 = vector.load %arg3[%c0_3, %c0_4] : memref<1x64xf32, #tpu.memory_space<vmem>>, vector<1x64xf32>
    %4 = vector.broadcast %3 : vector<1x64xf32> to vector<16x64xf32>
    %5 = arith.addf %2, %4 : vector<16x64xf32>
    %cst_5 = arith.constant 0.000000e+00 : f32
    %6 = vector.broadcast %cst_5 : f32 to vector<16x64xf32>
    %7 = arith.maximumf %5, %6 : vector<16x64xf32>
    %c0_6 = arith.constant 0 : index
    %c0_7 = arith.constant 0 : index
    %8 = vector.load %arg4[%c0_6, %c0_7] : memref<64x32xf32, #tpu.memory_space<vmem>>, vector<64x32xf32>
    %cst_8 = arith.constant dense<0.000000e+00> : vector<16x32xf32>
    %9 = tpu.matmul %7, %8, %cst_8 {dimension_numbers = #tpu.dot_dimension_numbers<[1], [0], [0], [1], [0, 0, 1, 1], [], []>} : vector<16x64xf32>, vector<64x32xf32>, vector<16x32xf32> -> vector<16x32xf32>
    %c0_9 = arith.constant 0 : index
    %c0_10 = arith.constant 0 : index
    %10 = vector.load %arg5[%c0_9, %c0_10] : memref<1x32xf32, #tpu.memory_space<vmem>>, vector<1x32xf32>
    %11 = vector.broadcast %10 : vector<1x32xf32> to vector<16x32xf32>
    %12 = arith.addf %9, %11 : vector<16x32xf32>
    %cst_11 = arith.constant 0.000000e+00 : f32
    %13 = vector.broadcast %cst_11 : f32 to vector<16x32xf32>
    %14 = arith.maximumf %12, %13 : vector<16x32xf32>
    %c0_12 = arith.constant 0 : index
    %c0_13 = arith.constant 0 : index
    %15 = vector.load %arg6[%c0_12, %c0_13] : memref<32x2xf32, #tpu.memory_space<vmem>>, vector<32x2xf32>
    %cst_14 = arith.constant dense<0.000000e+00> : vector<16x2xf32>
    %16 = tpu.matmul %14, %15, %cst_14 {dimension_numbers = #tpu.dot_dimension_numbers<[1], [0], [0], [1], [0, 0, 1, 1], [], []>} : vector<16x32xf32>, vector<32x2xf32>, vector<16x2xf32> -> vector<16x2xf32>
    %c0_15 = arith.constant 0 : index
    %c0_16 = arith.constant 0 : index
    %17 = vector.load %arg7[%c0_15, %c0_16] : memref<1x2xf32, #tpu.memory_space<vmem>>, vector<1x2xf32>
    %18 = vector.broadcast %17 : vector<1x2xf32> to vector<16x2xf32>
    %19 = arith.addf %16, %18 : vector<16x2xf32>
    %c0_17 = arith.constant 0 : index
    %c0_18 = arith.constant 0 : index
    %20 = vector.load %arg8[%c0_17, %c0_18] : memref<16x2xf32, #tpu.memory_space<vmem>>, vector<16x2xf32>
    tpu.vector_store %arg8[%c0_17, %c0_18], %19 {strides = array<i32>} : memref<16x2xf32, #tpu.memory_space<vmem>>, vector<16x2xf32>,
    return
  }
  func.func @transform_0(%arg0: i32) -> (i32, i32) {
    %c0_i32 = arith.constant 0 : i32
    %c0_i32_0 = arith.constant 0 : i32
    return %arg0, %c0_i32 : i32, i32
  }
  func.func @transform_1(%arg0: i32) -> (i32, i32) {
    %c0_i32 = arith.constant 0 : i32
    %c0_i32_0 = arith.constant 0 : i32
    %c0_i32_1 = arith.constant 0 : i32
    return %c0_i32, %c0_i32_0 : i32, i32
  }
  func.func @transform_2(%arg0: i32) -> (i32, i32) {
    %c0_i32 = arith.constant 0 : i32
    %c0_i32_0 = arith.constant 0 : i32
    %c0_i32_1 = arith.constant 0 : i32
    return %c0_i32, %c0_i32_0 : i32, i32
  }
  func.func @transform_3(%arg0: i32) -> (i32, i32) {
    %c0_i32 = arith.constant 0 : i32
    %c0_i32_0 = arith.constant 0 : i32
    %c0_i32_1 = arith.constant 0 : i32
    return %c0_i32, %c0_i32_0 : i32, i32
  }
  func.func @transform_4(%arg0: i32) -> (i32, i32) {
    %c0_i32 = arith.constant 0 : i32
    %c0_i32_0 = arith.constant 0 : i32
    %c0_i32_1 = arith.constant 0 : i32
    return %c0_i32, %c0_i32_0 : i32, i32
  }
  func.func @transform_5(%arg0: i32) -> (i32, i32) {
    %c0_i32 = arith.constant 0 : i32
    %c0_i32_0 = arith.constant 0 : i32
    %c0_i32_1 = arith.constant 0 : i32
    return %c0_i32, %c0_i32_0 : i32, i32
  }
  func.func @transform_6(%arg0: i32) -> (i32, i32) {
    %c0_i32 = arith.constant 0 : i32
    %c0_i32_0 = arith.constant 0 : i32
    %c0_i32_1 = arith.constant 0 : i32
    return %c0_i32, %c0_i32_0 : i32, i32
  }
  func.func @transform_7(%arg0: i32) -> (i32, i32) {
    %c0_i32 = arith.constant 0 : i32
    %c0_i32_0 = arith.constant 0 : i32
    return %arg0, %c0_i32 : i32, i32
  }
}

</mosaic_0001>

<llo_original>
// kernel: hiv_classifier_forward.1
$region0: #{hiv_classifier_forward.1}
  #allocation0 [shape = 'u32[]', space=smem, size = 0x4, offset = 0x4, fixed_abs, tag = 'smem constant byte address 0x4 - core index']
  #allocation1 [shape = 'u32[72,128]{1,0:T(1,128)}', space=vmem, size = 0x9000, scoped, tag = 'internal scratch']
  %s0 = inlined_call_operand.vmem [shape: f32[10,32], index: 0, kind: input, shape index: {}]
  %s1 = inlined_call_operand.vmem [shape: f32[32,64], index: 1, kind: input, shape index: {}]
  %s2 = inlined_call_operand.vmem [shape: f32[1,64], index: 2, kind: input, shape index: {}]
  %s3 = inlined_call_operand.vmem [shape: f32[64,32], index: 3, kind: input, shape index: {}]
  %s4 = inlined_call_operand.vmem [shape: f32[1,32], index: 4, kind: input, shape index: {}]
  %s5 = inlined_call_operand.vmem [shape: f32[32,2], index: 5, kind: input, shape index: {}]
  %s6 = inlined_call_operand.vmem [shape: f32[1,2], index: 6, kind: input, shape index: {}]
  %s7 = inlined_call_operand.vmem [shape: f32[10,2], index: 7, kind: output, shape index: {}]
  %s8 = sld [smem:[#allocation0]]
  $region38: #{hiv_classifier_forward.1} parent=0
    _
  %s10 = ssub.s32 1, %s8
  %s11 = scalar_select 0, %s10, %s8
  // Predicated region
  $region2: #{hiv_classifier_forward.1} parent=0 // pred_check
    _
  $region3: #{hiv_classifier_forward.1} parent=0 // pred_check_branch
    %13 = sbr.rel (0) target = $region5
  $region4: #{hiv_classifier_forward.1} parent=0 // pred_region
    _
  $region5: #{hiv_classifier_forward.1} parent=0 // pred_fallthru
    _
  // Predicated region
  $region6: #{hiv_classifier_forward.1} parent=0 // pred_check
    _
  $region7: #{hiv_classifier_forward.1} parent=0 // pred_check_branch
    %15 = sbr.rel (0) target = $region9
  $region8: #{hiv_classifier_forward.1} parent=0 // pred_region
    _
  $region9: #{hiv_classifier_forward.1} parent=0 // pred_fallthru
    _
  // Predicated region
  $region10: #{hiv_classifier_forward.1} parent=0 // pred_check
    _
  $region11: #{hiv_classifier_forward.1} parent=0 // pred_check_branch
    %17 = sbr.rel (0) target = $region13
  $region12: #{hiv_classifier_forward.1} parent=0 // pred_region
    _
  $region13: #{hiv_classifier_forward.1} parent=0 // pred_fallthru
    _
  // Predicated region
  $region14: #{hiv_classifier_forward.1} parent=0 // pred_check
    _
  $region15: #{hiv_classifier_forward.1} parent=0 // pred_check_branch
    %19 = sbr.rel (0) target = $region17
  $region16: #{hiv_classifier_forward.1} parent=0 // pred_region
    _
  $region17: #{hiv_classifier_forward.1} parent=0 // pred_fallthru
    _
  // Predicated region
  $region18: #{hiv_classifier_forward.1} parent=0 // pred_check
    _
  $region19: #{hiv_classifier_forward.1} parent=0 // pred_check_branch
    %21 = sbr.rel (0) target = $region21
  $region20: #{hiv_classifier_forward.1} parent=0 // pred_region
    _
  $region21: #{hiv_classifier_forward.1} parent=0 // pred_fallthru
    _
  // Predicated region
  $region22: #{hiv_classifier_forward.1} parent=0 // pred_check
    _
  $region23: #{hiv_classifier_forward.1} parent=0 // pred_check_branch
    %23 = sbr.rel (0) target = $region25
  $region24: #{hiv_classifier_forward.1} parent=0 // pred_region
    _
  $region25: #{hiv_classifier_forward.1} parent=0 // pred_fallthru
    _
  // Predicated region
  $region26: #{hiv_classifier_forward.1} parent=0 // pred_check
    _
  $region27: #{hiv_classifier_forward.1} parent=0 // pred_check_branch
    %25 = sbr.rel (0) target = $region29
  $region28: #{hiv_classifier_forward.1} parent=0 // pred_region
    _
  $region29: #{hiv_classifier_forward.1} parent=0 // pred_fallthru
    _
  %v26 = vld [vmem:[%s0] sm:$0xff]
  %v27 = vld [vmem:[%s0 + $0x8] sm:$0xff]
  %v28 = vld [vmem:[%s1] sm:$0xff]
  %v29 = vld [vmem:[%s1 + $0x8] sm:$0xff]
  %v30 = vld [vmem:[%s1 + $0x10] sm:$0xff]
  %v31 = vld [vmem:[%s1 + $0x18] sm:$0xff]
  %v32 = vld [vmem:[%s2] sm:$0x1]
  %v34 = vperm.slane %v32, 0
  %vm36 = vcmask 261120
  %v38 = vsel %vm36, %v26, 0
  %v41 = vsel %vm36, %v27, 0
  %43 = vmatpush.msra.mxu0 0.0
  %44 = vmatpush.msra.mxu0 0.0
  %45 = vmatpush.msra.mxu0 0.0
  %46 = vmatpush.msra.mxu0 0.0
  %47 = vmatpush.msra.mxu0 0.0
  %48 = vmatpush.msra.mxu0 0.0
  %49 = vmatpush.msra.mxu0 0.0
  %50 = vmatpush.msra.mxu0 0.0
  %51 = vmatpush.msra.mxu0 0.0
  %52 = vmatpush.msra.mxu0 0.0
  %53 = vmatpush.msra.mxu0 0.0
  %54 = vmatpush.msra.mxu0 0.0
  %55 = vmatpush.msra.mxu0 %v31
  %56 = vmatpush.msra.mxu0 %v30
  %57 = vmatpush.msra.mxu0 %v29
  %58 = vmatpush.msra.mxu0 %v28
  %59 = vmatmul.f32.gmra.mxu0 %v38
  %v60 = vpop.f32.mrf.mxu0
  %v61 = vadd.f32 %v34, %v60
  %62 = vmatmul.f32.gmra.mxu0 %v41
  %v63 = vpop.f32.mrf.mxu0
  %v64 = vadd.f32 %v34, %v63
  %65 = vdwg.mxu0
  %v66 = vmax.f32 %v61, 0.0
  %v67 = vmax.f32 %v64, 0.0
  %v68 = vld [vmem:[%s3] sm:$0xff]
  %v69 = vld [vmem:[%s3 + $0x8] sm:$0xff]
  %v70 = vld [vmem:[%s3 + $0x10] sm:$0xff]
  %v71 = vld [vmem:[%s3 + $0x18] sm:$0xff]
  %v72 = vld [vmem:[%s3 + $0x20] sm:$0xff]
  %v73 = vld [vmem:[%s3 + $0x28] sm:$0xff]
  %v74 = vld [vmem:[%s3 + $0x30] sm:$0xff]
  %v75 = vld [vmem:[%s3 + $0x38] sm:$0xff]
  %v76 = vld [vmem:[%s4] sm:$0x1]
  %v78 = vperm.slane %v76, 0
  %vm80 = vcmask 523264
  %v82 = vsel %vm80, %v66, 0
  %v85 = vsel %vm80, %v67, 0
  %87 = vmatpush.msra.mxu0 0.0
  %88 = vmatpush.msra.mxu0 0.0
  %89 = vmatpush.msra.mxu0 0.0
  %90 = vmatpush.msra.mxu0 0.0
  %91 = vmatpush.msra.mxu0 0.0
  %92 = vmatpush.msra.mxu0 0.0
  %93 = vmatpush.msra.mxu0 0.0
  %94 = vmatpush.msra.mxu0 0.0
  %95 = vmatpush.msra.mxu0 %v75
  %96 = vmatpush.msra.mxu0 %v74
  %97 = vmatpush.msra.mxu0 %v73
  %98 = vmatpush.msra.mxu0 %v72
  %99 = vmatpush.msra.mxu0 %v71
  %100 = vmatpush.msra.mxu0 %v70
  %101 = vmatpush.msra.mxu0 %v69
  %102 = vmatpush.msra.mxu0 %v68
  %103 = vmatmul.f32.gmra.mxu0 %v82
  %v104 = vpop.f32.mrf.mxu0
  %v105 = vadd.f32 %v78, %v104
  %106 = vmatmul.f32.gmra.mxu0 %v85
  %v107 = vpop.f32.mrf.mxu0
  %v108 = vadd.f32 %v78, %v107
  %109 = vdwg.mxu0
  %v110 = vmax.f32 %v105, 0.0
  %v111 = vmax.f32 %v108, 0.0
  %v112 = vld [vmem:[%s5] sm:$0xff]
  %v113 = vld [vmem:[%s5 + $0x8] sm:$0xff]
  %v114 = vld [vmem:[%s5 + $0x10] sm:$0xff]
  %v115 = vld [vmem:[%s5 + $0x18] sm:$0xff]
  %v116 = vld [vmem:[%s6] sm:$0x1]
  %v118 = vperm.slane %v116, 0
  %v121 = vsel %vm36, %v110, 0
  %v124 = vsel %vm36, %v111, 0
  %126 = vmatpush.msra.mxu0 0.0
  %127 = vmatpush.msra.mxu0 0.0
  %128 = vmatpush.msra.mxu0 0.0
  %129 = vmatpush.msra.mxu0 0.0
  %130 = vmatpush.msra.mxu0 0.0
  %131 = vmatpush.msra.mxu0 0.0
  %132 = vmatpush.msra.mxu0 0.0
  %133 = vmatpush.msra.mxu0 0.0
  %134 = vmatpush.msra.mxu0 0.0
  %135 = vmatpush.msra.mxu0 0.0
  %136 = vmatpush.msra.mxu0 0.0
  %137 = vmatpush.msra.mxu0 0.0
  %138 = vmatpush.msra.mxu0 %v115
  %139 = vmatpush.msra.mxu0 %v114
  %140 = vmatpush.msra.mxu0 %v113
  %141 = vmatpush.msra.mxu0 %v112
  %142 = vmatmul.f32.gmra.mxu0 %v121
  %v143 = vpop.f32.mrf.mxu0
  %v144 = vadd.f32 %v118, %v143
  %145 = vmatmul.f32.gmra.mxu0 %v124
  %v146 = vpop.f32.mrf.mxu0
  %v147 = vadd.f32 %v118, %v146
  %148 = vdwg.mxu0
  %vm149 = vcmask 15360
  %150 = vst.msk [vmem:[%s7] sm:$0xff] %vm149, %v144
  %151 = vst.msk [vmem:[%s7 + $0x8] sm:$0xff] %vm149, %v147
  // Predicated region
  $region30: #{hiv_classifier_forward.1} parent=0 // pred_check
    _
  $region31: #{hiv_classifier_forward.1} parent=0 // pred_check_branch
    %153 = sbr.rel (0) target = $region33
  $region32: #{hiv_classifier_forward.1} parent=0 // pred_region
    _
  $region33: #{hiv_classifier_forward.1} parent=0 // pred_fallthru
    _
  // Predicated region
  $region34: #{hiv_classifier_forward.1} parent=0 // pred_check
    _
  $region35: #{hiv_classifier_forward.1} parent=0 // pred_check_branch
    %155 = sbr.rel (0) target = $region37
  $region36: #{hiv_classifier_forward.1} parent=0 // pred_region
    _
  $region37: #{hiv_classifier_forward.1} parent=0 // pred_fallthru
    _

</llo_original>
